<compile_context>
chip_gen: v5e
topology: v5e:2x2
jax: 0.10.0
libtpu: 0.0.40
codegen_flags: <defaults>
</compile_context>

<pallas_src>
import functools

import jax
import jax.numpy as jnp
from jax.experimental import pallas as pl
from jax.experimental.pallas import tpu as pltpu


# ---------------------------------------------------------------------------
# Small helpers
# ---------------------------------------------------------------------------
def _cdiv(a, b):
    return (a + b - 1) // b


def _round_up(x, m):
    return ((x + m - 1) // m) * m


def _vmem_budget_bytes():
    """~75% of physical VMEM; conservative fallback assumes the smallest (v7x, 64 MiB)."""
    phys = None
    try:
        get_info = getattr(pltpu, "get_tpu_info", None)
        if get_info is not None:
            phys = getattr(get_info(), "vmem_capacity_bytes", None)
    except Exception:
        phys = None
    if not phys or int(phys) <= 0:
        phys = 64 * 1024 * 1024
    return (int(phys) * 3) // 4


def _choose_group(d, h):
    """Row-group size g for the lane-dense slab layout (g*d == 128 lanes)."""
    if d >= 128 or (128 % d) != 0:
        return 1
    g = 128 // d
    # Block-diagonal weights are kept resident (double-buffered): keep them modest.
    w_bytes = 4 * ((g * d) * (g * h) + (g * h) * 2 * 128)
    if 2 * w_bytes > 16 * 1024 * 1024:
        return 1
    return g


def _block_diag(w, g):
    if g == 1:
        return w
    k, n = w.shape
    eye = jnp.eye(g, dtype=w.dtype)
    return jnp.einsum("ij,kn->ikjn", eye, w).reshape(g * k, g * n)


# ---------------------------------------------------------------------------
# Parameter init / one-time layout preparation
# ---------------------------------------------------------------------------
def init_conditioner_params(key, d, hidden):
    k1, k2, k3 = jax.random.split(key, 3)
    w1 = jax.random.normal(k1, (d, hidden), jnp.float32) * 0.1
    b1 = jnp.zeros((1, hidden), jnp.float32)
    wt = jax.random.normal(k2, (hidden, d), jnp.float32) * 0.1
    bt = jnp.zeros((1, d), jnp.float32)
    ws = jax.random.normal(k3, (hidden, d), jnp.float32) * 0.05
    bs = jnp.zeros((1, d), jnp.float32)
    return (w1, b1, wt, bt, ws, bs)


def prepare_transformer_params(params, matmul_dtype=jnp.bfloat16):
    """One-time weight layout prep (outside the hot path):
       * block-diagonal expansion for the lane-dense slab layout when D < 128,
       * fused conditioner heads with 128-lane-aligned per-head column offsets,
       * matmul weights cast to `matmul_dtype` (bf16 recommended); biases stay f32.
       Pass matmul_dtype=jnp.float32 for exact-precision conditioner matmuls."""
    w1, b1, wt, bt, ws, bs = params
    d, h = w1.shape
    g = _choose_group(d, h)

    w1p = _block_diag(w1, g)                 # (g*D, g*H)
    wtp = _block_diag(wt, g)                 # (g*H, g*D)
    wsp = _block_diag(ws, g)
    b1p = jnp.tile(b1, (1, g))               # (1, g*H)
    btp = jnp.tile(bt, (1, g))               # (1, g*D)
    bsp = jnp.tile(bs, (1, g))

    hw = g * d                               # per-head width (== streamed lane width)
    hs = _round_up(hw, 128)                  # 128-aligned head stride
    k2 = g * h
    wts = jnp.zeros((k2, 2 * hs), jnp.float32)
    wts = wts.at[:, :hw].set(wtp).at[:, hs:hs + hw].set(wsp)
    bts = jnp.zeros((1, 2 * hs), jnp.float32)
    bts = bts.at[:, :hw].set(btp).at[:, hs:hs + hw].set(bsp)

    return (w1p.astype(matmul_dtype), b1p.astype(jnp.float32),
            wts.astype(matmul_dtype), bts.astype(jnp.float32))


def _ensure_prepared(params):
    return params if len(params) == 4 else prepare_transformer_params(params)


# ---------------------------------------------------------------------------
# Kernel (one body for forward / inverse, slab or plain layout)
# ---------------------------------------------------------------------------
def _affine_kernel(x_ref, w1_ref, b1_ref, wts_ref, bts_ref, y_ref,
                   *, is_forward, head_stride, mm_dtype):
    x = x_ref[...]                                                   # (tb, hw) f32
    hw = x.shape[-1]
    h = jnp.dot(x.astype(mm_dtype), w1_ref[...],
                preferred_element_type=jnp.float32) + b1_ref[...]
    h = jnp.maximum(h, 0.0)                                          # relu in f32
    ts = jnp.dot(h.astype(mm_dtype), wts_ref[...],
                 preferred_element_type=jnp.float32) + bts_ref[...]
    translation = ts[:, :hw]                                         # lane-aligned split
    log_scale = ts[:, head_stride:head_stride + hw]
    if is_forward:
        y_ref[...] = jnp.exp(log_scale) * x + translation            # scale*v + t
    else:
        # (v - t) / scale == (v - t) * exp(-log_scale): single EUP op, no VPU divide
        y_ref[...] = (x - translation) * jnp.exp(-log_scale)


# ---------------------------------------------------------------------------
# Wrapper
# ---------------------------------------------------------------------------
def _call(is_forward, value, prep):
    w1p, b1p, wts, bts = prep
    value = value.astype(jnp.float32)
    b, d = value.shape
    k1, k2 = w1p.shape                       # (g*D, g*H)
    assert k1 % d == 0, "prepared params do not match the value feature dim"
    g = k1 // d
    hw = k1                                  # streamed-tile lane width == head width
    head_stride = wts.shape[1] // 2

    # ---- tile selection driven by an explicit per-generation VMEM budget ----
    budget = _vmem_budget_bytes()
    lane_w = _round_up(hw, 128)              # VMEM rows are padded to 128 lanes
    hid_w = _round_up(k2, 128)
    per_row = 4 * (2 * 2 * lane_w + hid_w + 2 * head_stride)   # x,y dbl-buffered + h + ts
    w_bytes = 2 * (w1p.size * w1p.dtype.itemsize + wts.size * wts.dtype.itemsize
                   + 4 * (b1p.size + bts.size))                # resident, double-buffered
    avail = max(budget - w_bytes - (2 << 20), 8 * per_row)
    tb_max = max(8, min(avail // per_row, (4 << 20) // (4 * lane_w)))  # ~4 MiB / streamed buf
    tb_max = max(8, (tb_max // 8) * 8)

    rows = _cdiv(b, g)                       # total slab rows
    if rows >= 1024:                         # enough work: keep both v7x TensorCores busy
        tb_max = min(tb_max, _round_up(_cdiv(rows, 2), 8))
    n_blocks = _cdiv(rows, tb_max)
    tb = _round_up(_cdiv(rows, n_blocks), 8)  # even split: bounded padding
    rows_p = n_blocks * tb
    bp = rows_p * g

    if bp != b:
        value = jnp.pad(value, ((0, bp - b), (0, 0)))
    x_slab = value.reshape(rows_p, hw)       # lane-dense view; free (row-major) reshape in HBM

    kernel = functools.partial(_affine_kernel, is_forward=is_forward,
                               head_stride=head_stride, mm_dtype=w1p.dtype)

    flops = 2 * rows_p * hw * k2 + 2 * rows_p * k2 * (2 * head_stride) + 5 * rows_p * hw
    bytes_accessed = 4 * 2 * rows_p * hw + w_bytes // 2

    out = pl.pallas_call(
        kernel,
        out_shape=jax.ShapeDtypeStruct((rows_p, hw), jnp.float32),
        grid_spec=pltpu.PrefetchScalarGridSpec(
            num_scalar_prefetch=0,
            grid=(n_blocks,),
            in_specs=[
                # streamed activation tile: auto double-buffered over the batch grid
                pl.BlockSpec((tb, hw), lambda i: (i, 0)),
                # weights & biases: same block every step -> resident in VMEM
                pl.BlockSpec((k1, k2), lambda i: (0, 0)),
                pl.BlockSpec((1, k2), lambda i: (0, 0)),
                pl.BlockSpec((k2, 2 * head_stride), lambda i: (0, 0)),
                pl.BlockSpec((1, 2 * head_stride), lambda i: (0, 0)),
            ],
            out_specs=pl.BlockSpec((tb, hw), lambda i: (i, 0)),
        ),
        compiler_params=pltpu.CompilerParams(
            dimension_semantics=("parallel",),            # megacore sharding on v7x
            vmem_limit_bytes=int(budget),
        ),
        cost_estimate=pl.CostEstimate(
            flops=flops,
            transcendentals=rows_p * hw,
            bytes_accessed=bytes_accessed,
        ),
    )(x_slab, w1p, b1p, wts, bts)

    return out.reshape(bp, d)[:b]


def transformer_forward(value, params):
    """y = exp(log_scale) * value + translation, (translation, log_scale) = C(value)."""
    return _call(True, value, _ensure_prepared(params))


def transformer_inverse(value, params):
    """x = (value - translation) / exp(log_scale), (translation, log_scale) = C(value)."""
    return _call(False, value, _ensure_prepared(params))


# ---------------------------------------------------------------------------
# Pure-JAX reference of the exact module math
# ---------------------------------------------------------------------------
def _reference(value, raw_params, is_forward=True, matmul_dtype=jnp.float32):
    w1, b1, wt, bt, ws, bs = raw_params
    v = value.astype(jnp.float32)
    vm = v.astype(matmul_dtype)
    h = jnp.maximum(jnp.dot(vm, w1.astype(matmul_dtype),
                            preferred_element_type=jnp.float32) + b1, 0.0)
    hm = h.astype(matmul_dtype)
    translation = jnp.dot(hm, wt.astype(matmul_dtype),
                          preferred_element_type=jnp.float32) + bt
    log_scale = jnp.dot(hm, ws.astype(matmul_dtype),
                        preferred_element_type=jnp.float32) + bs
    scale = jnp.exp(log_scale)
    if is_forward:
        return scale * v + translation
    return (v - translation) / scale


# ---------------------------------------------------------------------------
if __name__ == "__main__":
    key = jax.random.PRNGKey(0)
    k_val, k_val2, k_val3, k_par, k_par2 = jax.random.split(key, 5)

    # --- small-D path: lane-dense slab mode (D=16 -> g=8, 128-lane tiles) ---
    B, D, H = 8, 16, 32
    raw = init_conditioner_params(k_par, D, H)
    prep = prepare_transformer_params(raw, matmul_dtype=jnp.bfloat16)
    value = jax.random.normal(k_val, (B, D), jnp.float32)

    y = jax.block_until_ready(transformer_forward(value, prep))
    assert jnp.allclose(y, _reference(value, raw, True, jnp.bfloat16),
                        atol=5e-3, rtol=5e-3), "forward mismatch (slab)"
    assert jnp.allclose(y, _reference(value, raw, True),
                        atol=5e-2, rtol=5e-2), "forward drifted from f32 reference"

    x_inv = jax.block_until_ready(transformer_inverse(value, prep))
    assert jnp.allclose(x_inv, _reference(value, raw, False, jnp.bfloat16),
                        atol=5e-3, rtol=5e-3), "inverse mismatch (slab)"

    # --- padded batch (B not a multiple of the row-group / tile) ---
    value2 = jax.random.normal(k_val2, (20, D), jnp.float32)
    y2 = jax.block_until_ready(transformer_forward(value2, prep))
    assert jnp.allclose(y2, _reference(value2, raw, True, jnp.bfloat16),
                        atol=5e-3, rtol=5e-3), "padded-batch forward mismatch"

    # --- D >= 128 path: plain mode with fused, 128-aligned head split ---
    B3, D3, H3 = 16, 128, 128
    raw3 = init_conditioner_params(k_par2, D3, H3)
    prep3 = prepare_transformer_params(raw3, matmul_dtype=jnp.bfloat16)
    value3 = jax.random.normal(k_val3, (B3, D3), jnp.float32)
    y3 = jax.block_until_ready(transformer_forward(value3, prep3))
    assert jnp.allclose(y3, _reference(value3, raw3, True, jnp.bfloat16),
                        atol=5e-3, rtol=5e-3), "forward mismatch (plain)"
    x3 = jax.block_until_ready(transformer_inverse(value3, prep3))
    assert jnp.allclose(x3, _reference(value3, raw3, False, jnp.bfloat16),
                        atol=5e-3, rtol=5e-3), "inverse mismatch (plain)"

    print("KERNEL_OK")
</pallas_src>

<mosaic_0001>
module attributes {stable_mosaic.version = 11 : i64} {
  func.func @_affine_kernel(%arg0: i32, %arg1: memref<8x128xf32, #tpu.memory_space<vmem>>, %arg2: memref<128x256xbf16, #tpu.memory_space<vmem>>, %arg3: memref<1x256xf32, #tpu.memory_space<vmem>>, %arg4: memref<256x256xbf16, #tpu.memory_space<vmem>>, %arg5: memref<1x256xf32, #tpu.memory_space<vmem>>, %arg6: memref<8x128xf32, #tpu.memory_space<vmem>>) attributes {dimension_semantics = [#tpu.dimension_semantics<parallel>], iteration_bounds = array<i64: 1>, scalar_prefetch = 0 : i64, scratch_operands = 0 : i64, tpu.core_type = #tpu.core_type<tc>, window_params = [{transform_indices = @transform_0, window_bounds = array<i64: 8, 128>}, {pipeline_mode = #tpu.pipeline_mode<synchronous>, transform_indices = @transform_1, window_bounds = array<i64: 128, 256>}, {pipeline_mode = #tpu.pipeline_mode<synchronous>, transform_indices = @transform_2, window_bounds = array<i64: 1, 256>}, {pipeline_mode = #tpu.pipeline_mode<synchronous>, transform_indices = @transform_3, window_bounds = array<i64: 256, 256>}, {pipeline_mode = #tpu.pipeline_mode<synchronous>, transform_indices = @transform_4, window_bounds = array<i64: 1, 256>}, {transform_indices = @transform_5, window_bounds = array<i64: 8, 128>}]} {
    %c0 = arith.constant 0 : index
    %c0_0 = arith.constant 0 : index
    %0 = vector.load %arg1[%c0, %c0_0] : memref<8x128xf32, #tpu.memory_space<vmem>>, vector<8x128xf32>
    %1 = arith.truncf %0 : vector<8x128xf32> to vector<8x128xbf16>
    %c0_1 = arith.constant 0 : index
    %c0_2 = arith.constant 0 : index
    %2 = vector.load %arg2[%c0_1, %c0_2] : memref<128x256xbf16, #tpu.memory_space<vmem>>, vector<128x256xbf16>
    %cst = arith.constant dense<0.000000e+00> : vector<8x256xf32>
    %3 = tpu.matmul %1, %2, %cst {dimension_numbers = #tpu.dot_dimension_numbers<[1], [0], [0], [1], [0, 0, 1, 1], [], []>} : vector<8x128xbf16>, vector<128x256xbf16>, vector<8x256xf32> -> vector<8x256xf32>
    %c0_3 = arith.constant 0 : index
    %c0_4 = arith.constant 0 : index
    %4 = vector.load %arg3[%c0_3, %c0_4] : memref<1x256xf32, #tpu.memory_space<vmem>>, vector<1x256xf32>
    %5 = vector.broadcast %4 : vector<1x256xf32> to vector<8x256xf32>
    %6 = arith.addf %3, %5 : vector<8x256xf32>
    %cst_5 = arith.constant 0.000000e+00 : f32
    %7 = vector.broadcast %cst_5 : f32 to vector<8x256xf32>
    %8 = arith.maximumf %6, %7 : vector<8x256xf32>
    %9 = arith.truncf %8 : vector<8x256xf32> to vector<8x256xbf16>
    %c0_6 = arith.constant 0 : index
    %c0_7 = arith.constant 0 : index
    %10 = vector.load %arg4[%c0_6, %c0_7] : memref<256x256xbf16, #tpu.memory_space<vmem>>, vector<256x256xbf16>
    %cst_8 = arith.constant dense<0.000000e+00> : vector<8x256xf32>
    %11 = tpu.matmul %9, %10, %cst_8 {dimension_numbers = #tpu.dot_dimension_numbers<[1], [0], [0], [1], [0, 0, 1, 1], [], []>} : vector<8x256xbf16>, vector<256x256xbf16>, vector<8x256xf32> -> vector<8x256xf32>
    %c0_9 = arith.constant 0 : index
    %c0_10 = arith.constant 0 : index
    %12 = vector.load %arg5[%c0_9, %c0_10] : memref<1x256xf32, #tpu.memory_space<vmem>>, vector<1x256xf32>
    %13 = vector.broadcast %12 : vector<1x256xf32> to vector<8x256xf32>
    %14 = arith.addf %11, %13 : vector<8x256xf32>
    %15 = vector.extract_strided_slice %14 {offsets = [0, 0], sizes = [8, 128], strides = [1, 1]} : vector<8x256xf32> to vector<8x128xf32>
    %16 = vector.extract_strided_slice %14 {offsets = [0, 128], sizes = [8, 128], strides = [1, 1]} : vector<8x256xf32> to vector<8x128xf32>
    %17 = math.exp %16 : vector<8x128xf32>
    %18 = arith.mulf %17, %0 : vector<8x128xf32>
    %19 = arith.addf %18, %15 : vector<8x128xf32>
    %c0_11 = arith.constant 0 : index
    %c0_12 = arith.constant 0 : index
    %20 = vector.load %arg6[%c0_11, %c0_12] : memref<8x128xf32, #tpu.memory_space<vmem>>, vector<8x128xf32>
    tpu.vector_store %arg6[%c0_11, %c0_12], %19 {strides = array<i32>} : memref<8x128xf32, #tpu.memory_space<vmem>>, vector<8x128xf32>,
    return
  }
  func.func @transform_0(%arg0: i32) -> (i32, i32) {
    %c0_i32 = arith.constant 0 : i32
    %c0_i32_0 = arith.constant 0 : i32
    return %arg0, %c0_i32 : i32, i32
  }
  func.func @transform_1(%arg0: i32) -> (i32, i32) {
    %c0_i32 = arith.constant 0 : i32
    %c0_i32_0 = arith.constant 0 : i32
    %c0_i32_1 = arith.constant 0 : i32
    return %c0_i32, %c0_i32_0 : i32, i32
  }
  func.func @transform_2(%arg0: i32) -> (i32, i32) {
    %c0_i32 = arith.constant 0 : i32
    %c0_i32_0 = arith.constant 0 : i32
    %c0_i32_1 = arith.constant 0 : i32
    return %c0_i32, %c0_i32_0 : i32, i32
  }
  func.func @transform_3(%arg0: i32) -> (i32, i32) {
    %c0_i32 = arith.constant 0 : i32
    %c0_i32_0 = arith.constant 0 : i32
    %c0_i32_1 = arith.constant 0 : i32
    return %c0_i32, %c0_i32_0 : i32, i32
  }
  func.func @transform_4(%arg0: i32) -> (i32, i32) {
    %c0_i32 = arith.constant 0 : i32
    %c0_i32_0 = arith.constant 0 : i32
    %c0_i32_1 = arith.constant 0 : i32
    return %c0_i32, %c0_i32_0 : i32, i32
  }
  func.func @transform_5(%arg0: i32) -> (i32, i32) {
    %c0_i32 = arith.constant 0 : i32
    %c0_i32_0 = arith.constant 0 : i32
    return %arg0, %c0_i32 : i32, i32
  }
}

</mosaic_0001>

<llo_original>
// kernel: tpu_custom_call.1
$region0: #{tpu_custom_call.1}
  #allocation0 [shape = 'u32[]', space=smem, size = 0x4, offset = 0x4, fixed_abs, tag = 'smem constant byte address 0x4 - core index']
  #allocation1 [shape = 'u32[72,128]{1,0:T(1,128)}', space=vmem, size = 0x9000, scoped, tag = 'internal scratch']
  %s0 = inlined_call_operand.hbm [shape: f32[8,128], index: 0, kind: input, shape index: {}]
  %s1 = inlined_call_operand.hbm [shape: bf16[128,256], index: 1, kind: input, shape index: {}]
  %s2 = inlined_call_operand.hbm [shape: f32[1,256], index: 2, kind: input, shape index: {}]
  %s3 = inlined_call_operand.hbm [shape: bf16[256,256], index: 3, kind: input, shape index: {}]
  %s4 = inlined_call_operand.vmem [shape: f32[1,256], index: 4, kind: input, shape index: {}]
  %s5 = inlined_call_operand.hbm [shape: f32[8,128], index: 5, kind: output, shape index: {}]
  %s6 = sld [smem:[#allocation0]]
  $region46: #{tpu_custom_call.1} parent=0
    _
  %s8 = ssub.s32 1, %s6
  %s9 = scalar_select 0, %s8, %s6
  $region1: #{tpu_custom_call.1} parent=0
    #allocation2 [shape = 'u8[4096]{0}', space=vmem, size = 0x1000, scoped, tag = 'input window, operand 0, single buffered']
    #allocation3 [shape = 's32[1]{0}', space=sflag, size = 0x4, scoped, tag = 'scoped memory for tpu_custom_call.1']
    #allocation4 [shape = 's32[1]{0}', space=sflag, size = 0x4, scoped, tag = 'scoped memory for tpu_custom_call.1']
    #allocation5 [shape = 'u8[65536]{0}', space=vmem, size = 0x10000, scoped, tag = 'input window, operand 1, single buffered']
    #allocation6 [shape = 's32[1]{0}', space=sflag, size = 0x4, scoped, tag = 'scoped memory for tpu_custom_call.1']
    #allocation7 [shape = 'u8[1024]{0}', space=vmem, size = 0x400, scoped, tag = 'input window, operand 2, single buffered']
    #allocation8 [shape = 'u8[131072]{0}', space=vmem, size = 0x20000, scoped, tag = 'input window, operand 3, single buffered']
    #allocation9 [shape = 's32[1]{0}', space=sflag, size = 0x4, scoped, tag = 'scoped memory for tpu_custom_call.1']
    #allocation10 [shape = 'u8[4096]{0}', space=vmem, size = 0x1000, scoped, tag = 'output window, operand 0, single buffered']
    %10 = vsyncpa [#allocation3], 0
    %11 = vsyncpa [#allocation6], 0
    %12 = vsyncpa [#allocation9], 0
    %13 = vsyncpa [#allocation4], 0
    // Predicated region
    $region2: #{tpu_custom_call.1} parent=1 // pred_check
      _
    $region3: #{tpu_custom_call.1} parent=1 // pred_check_branch
      %15 = sbr.rel (0) target = $region5
    $region4: #{tpu_custom_call.1} parent=1 // pred_region
      %17 = vsyncadd [#allocation3], 0
      %s19 = sshll.u32 %s0, 4
      %s20 = int_to_ptr.hbm [resolvable:$true] %s19
      %s21 = sshll.u32 [#allocation2], 4
      %s22 = int_to_ptr.vmem [resolvable:$true] %s21
      %24 = dma.hbm_to_vmem [thread:$0]  %s20, 128, %s22, [#allocation3]
    $region5: #{tpu_custom_call.1} parent=1 // pred_fallthru
      _
    // Predicated region
    $region6: #{tpu_custom_call.1} parent=1 // pred_check
      _
    $region7: #{tpu_custom_call.1} parent=1 // pred_check_branch
      %26 = sbr.rel (0) target = $region9
    $region8: #{tpu_custom_call.1} parent=1 // pred_region
      %28 = vsyncadd [#allocation6], 0
      %s29 = sshll.u32 %s1, 4
      %s30 = int_to_ptr.hbm [resolvable:$true] %s29
      %s31 = sshll.u32 [#allocation5], 4
      %s32 = int_to_ptr.vmem [resolvable:$true] %s31
      %37 = dma.hbm_to_vmem [thread:$0]  %s30, 2048, %s32, [#allocation6], 128, 128, 8
    $region9: #{tpu_custom_call.1} parent=1 // pred_fallthru
      _
    // Predicated region
    $region10: #{tpu_custom_call.1} parent=1 // pred_check
      _
    $region11: #{tpu_custom_call.1} parent=1 // pred_check_branch
      %39 = sbr.rel (0) target = $region13
    $region12: #{tpu_custom_call.1} parent=1 // pred_region
      %41 = vsyncadd [#allocation6], 0
      %s43 = sshll.u32 %s2, 4
      %s44 = int_to_ptr.hbm [resolvable:$true] %s43
      %s45 = sshll.u32 [#allocation7], 4
      %s46 = int_to_ptr.vmem [resolvable:$true] %s45
      %48 = dma.hbm_to_vmem [thread:$0]  %s44, 32, %s46, [#allocation6]
    $region13: #{tpu_custom_call.1} parent=1 // pred_fallthru
      _
    // Predicated region
    $region14: #{tpu_custom_call.1} parent=1 // pred_check
      _
    $region15: #{tpu_custom_call.1} parent=1 // pred_check_branch
      %50 = sbr.rel (0) target = $region17
    $region16: #{tpu_custom_call.1} parent=1 // pred_region
      %52 = vsyncadd [#allocation9], 0
      %s53 = sshll.u32 %s3, 4
      %s54 = int_to_ptr.hbm [resolvable:$true] %s53
      %s55 = sshll.u32 [#allocation8], 4
      %s56 = int_to_ptr.vmem [resolvable:$true] %s55
      %61 = dma.hbm_to_vmem [thread:$0]  %s54, 4096, %s56, [#allocation9], 128, 128, 8
    $region17: #{tpu_custom_call.1} parent=1 // pred_fallthru
      _
    // Predicated region
    $region18: #{tpu_custom_call.1} parent=1 // pred_check
      _
    $region19: #{tpu_custom_call.1} parent=1 // pred_check_branch
      %63 = sbr.rel (0) target = $region21
    $region20: #{tpu_custom_call.1} parent=1 // pred_region
      _
    $region21: #{tpu_custom_call.1} parent=1 // pred_fallthru
      _
    // Predicated region
    $region22: #{tpu_custom_call.1} parent=1 // pred_check
      _
    $region23: #{tpu_custom_call.1} parent=1 // pred_check_branch
      %65 = sbr.rel (0) target = $region25
    $region24: #{tpu_custom_call.1} parent=1 // pred_region
      %67 = dma.done [#allocation3], 128
    $region25: #{tpu_custom_call.1} parent=1 // pred_fallthru
      _
    // Predicated region
    $region26: #{tpu_custom_call.1} parent=1 // pred_check
      _
    $region27: #{tpu_custom_call.1} parent=1 // pred_check_branch
      %69 = sbr.rel (0) target = $region29
    $region28: #{tpu_custom_call.1} parent=1 // pred_region
      %71 = dma.done [#allocation6], 2048
    $region29: #{tpu_custom_call.1} parent=1 // pred_fallthru
      _
    // Predicated region
    $region30: #{tpu_custom_call.1} parent=1 // pred_check
      _
    $region31: #{tpu_custom_call.1} parent=1 // pred_check_branch
      %73 = sbr.rel (0) target = $region33
    $region32: #{tpu_custom_call.1} parent=1 // pred_region
      %75 = dma.done [#allocation6], 32
    $region33: #{tpu_custom_call.1} parent=1 // pred_fallthru
      _
    // Predicated region
    $region34: #{tpu_custom_call.1} parent=1 // pred_check
      _
    $region35: #{tpu_custom_call.1} parent=1 // pred_check_branch
      %77 = sbr.rel (0) target = $region37
    $region36: #{tpu_custom_call.1} parent=1 // pred_region
      %79 = dma.done [#allocation9], 4096
    $region37: #{tpu_custom_call.1} parent=1 // pred_fallthru
      _
    %v80 = vld [vmem:[#allocation2] sm:$0xff]
    %v81 = vpack.c.bf16 %v80, %v80
    %v82 = vld [vmem:[#allocation5] sm:$0xff]
    %v83 = vld [vmem:[#allocation5 + $0x8] sm:$0xff]
    %v84 = vld [vmem:[#allocation5 + $0x10] sm:$0xff]
    %v85 = vld [vmem:[#allocation5 + $0x18] sm:$0xff]
    %v86 = vld [vmem:[#allocation5 + $0x20] sm:$0xff]
    %v87 = vld [vmem:[#allocation5 + $0x28] sm:$0xff]
    %v88 = vld [vmem:[#allocation5 + $0x30] sm:$0xff]
    %v89 = vld [vmem:[#allocation5 + $0x38] sm:$0xff]
    %v90 = vld [vmem:[#allocation5 + $0x40] sm:$0xff]
    %v91 = vld [vmem:[#allocation5 + $0x48] sm:$0xff]
    %v92 = vld [vmem:[#allocation5 + $0x50] sm:$0xff]
    %v93 = vld [vmem:[#allocation5 + $0x58] sm:$0xff]
    %v94 = vld [vmem:[#allocation5 + $0x60] sm:$0xff]
    %v95 = vld [vmem:[#allocation5 + $0x68] sm:$0xff]
    %v96 = vld [vmem:[#allocation5 + $0x70] sm:$0xff]
    %v97 = vld [vmem:[#allocation5 + $0x78] sm:$0xff]
    %v98 = vld [vmem:[#allocation7] sm:$0x3]
    %v100 = vperm.slane %v98, 0
    %v101 = vperm.slane %v98, 1
    %v120 = vunpack.c.l.b16 %v82
    %v121 = vunpack.c.h.b16 %v82
    %v122 = vunpack.c.l.b16 %v83
    %v123 = vunpack.c.h.b16 %v83
    %v124 = vunpack.c.l.b16 %v84
    %v125 = vunpack.c.h.b16 %v84
    %v126 = vunpack.c.l.b16 %v85
    %v127 = vunpack.c.h.b16 %v85
    %v128 = vunpack.c.l.b16 %v86
    %v129 = vunpack.c.h.b16 %v86
    %v130 = vunpack.c.l.b16 %v87
    %v131 = vunpack.c.h.b16 %v87
    %v132 = vunpack.c.l.b16 %v88
    %v133 = vunpack.c.h.b16 %v88
    %v134 = vunpack.c.l.b16 %v89
    %v135 = vunpack.c.h.b16 %v89
    %v136 = vunpack.c.l.b16 %v90
    %v137 = vunpack.c.h.b16 %v90
    %v138 = vunpack.c.l.b16 %v91
    %v139 = vunpack.c.h.b16 %v91
    %v140 = vunpack.c.l.b16 %v92
    %v141 = vunpack.c.h.b16 %v92
    %v142 = vunpack.c.l.b16 %v93
    %v143 = vunpack.c.h.b16 %v93
    %v144 = vunpack.c.l.b16 %v94
    %v145 = vunpack.c.h.b16 %v94
    %v146 = vunpack.c.l.b16 %v95
    %v147 = vunpack.c.h.b16 %v95
    %v148 = vunpack.c.l.b16 %v96
    %v149 = vunpack.c.h.b16 %v96
    %v150 = vunpack.c.l.b16 %v97
    %v151 = vunpack.c.h.b16 %v97
    %v152 = vpack.c.b16 %v122, %v120
    %v153 = vpack.c.b16 %v123, %v121
    %v154 = vpack.c.b16 %v126, %v124
    %v155 = vpack.c.b16 %v127, %v125
    %v156 = vpack.c.b16 %v130, %v128
    %v157 = vpack.c.b16 %v131, %v129
    %v158 = vpack.c.b16 %v134, %v132
    %v159 = vpack.c.b16 %v135, %v133
    %v160 = vpack.c.b16 %v138, %v136
    %v161 = vpack.c.b16 %v139, %v137
    %v162 = vpack.c.b16 %v142, %v140
    %v163 = vpack.c.b16 %v143, %v141
    %v164 = vpack.c.b16 %v146, %v144
    %v165 = vpack.c.b16 %v147, %v145
    %v166 = vpack.c.b16 %v150, %v148
    %v167 = vpack.c.b16 %v151, %v149
    %184 = vmatpush.bf16.msra.mxu0 %v166
    %185 = vmatpush.bf16.msra.mxu0 %v164
    %186 = vmatpush.bf16.msra.mxu0 %v162
    %187 = vmatpush.bf16.msra.mxu0 %v160
    %188 = vmatpush.bf16.msra.mxu0 %v158
    %189 = vmatpush.bf16.msra.mxu0 %v156
    %190 = vmatpush.bf16.msra.mxu0 %v154
    %191 = vmatpush.bf16.msra.mxu0 %v152
    %192 = vmatmul.bf16.gmra.mxu0 %v81
    %v193 = vpop.f32.mrf.mxu0
    %v194 = vadd.f32 %v100, %v193
    %v195 = vpop.f32.mrf.mxu0
    %196 = vdwg.mxu0
    %197 = vmatpush.bf16.msra.mxu0 %v167
    %198 = vmatpush.bf16.msra.mxu0 %v165
    %199 = vmatpush.bf16.msra.mxu0 %v163
    %200 = vmatpush.bf16.msra.mxu0 %v161
    %201 = vmatpush.bf16.msra.mxu0 %v159
    %202 = vmatpush.bf16.msra.mxu0 %v157
    %203 = vmatpush.bf16.msra.mxu0 %v155
    %204 = vmatpush.bf16.msra.mxu0 %v153
    %205 = vmatmul.bf16.gmra.mxu0 %v81
    %v206 = vpop.f32.mrf.mxu0
    %v207 = vadd.f32 %v101, %v206
    %v208 = vpop.f32.mrf.mxu0
    %209 = vdwg.mxu0
    %v210 = vmax.f32 %v194, 0.0
    %v211 = vmax.f32 %v207, 0.0
    %v212 = vpack.c.bf16 %v210, %v210
    %v213 = vpack.c.bf16 %v211, %v211
    %v214 = vld [vmem:[#allocation8] sm:$0xff]
    %v215 = vld [vmem:[#allocation8 + $0x8] sm:$0xff]
    %v216 = vld [vmem:[#allocation8 + $0x10] sm:$0xff]
    %v217 = vld [vmem:[#allocation8 + $0x18] sm:$0xff]
    %v218 = vld [vmem:[#allocation8 + $0x20] sm:$0xff]
    %v219 = vld [vmem:[#allocation8 + $0x28] sm:$0xff]
    %v220 = vld [vmem:[#allocation8 + $0x30] sm:$0xff]
    %v221 = vld [vmem:[#allocation8 + $0x38] sm:$0xff]
    %v222 = vld [vmem:[#allocation8 + $0x40] sm:$0xff]
    %v223 = vld [vmem:[#allocation8 + $0x48] sm:$0xff]
    %v224 = vld [vmem:[#allocation8 + $0x50] sm:$0xff]
    %v225 = vld [vmem:[#allocation8 + $0x58] sm:$0xff]
    %v226 = vld [vmem:[#allocation8 + $0x60] sm:$0xff]
    %v227 = vld [vmem:[#allocation8 + $0x68] sm:$0xff]
    %v228 = vld [vmem:[#allocation8 + $0x70] sm:$0xff]
    %v229 = vld [vmem:[#allocation8 + $0x78] sm:$0xff]
    %v230 = vld [vmem:[#allocation8 + $0x80] sm:$0xff]
    %v231 = vld [vmem:[#allocation8 + $0x88] sm:$0xff]
    %v232 = vld [vmem:[#allocation8 + $0x90] sm:$0xff]
    %v233 = vld [vmem:[#allocation8 + $0x98] sm:$0xff]
    %v234 = vld [vmem:[#allocation8 + $0xa0] sm:$0xff]
    %v235 = vld [vmem:[#allocation8 + $0xa8] sm:$0xff]
    %v236 = vld [vmem:[#allocation8 + $0xb0] sm:$0xff]
    %v237 = vld [vmem:[#allocation8 + $0xb8] sm:$0xff]
    %v238 = vld [vmem:[#allocation8 + $0xc0] sm:$0xff]
    %v239 = vld [vmem:[#allocation8 + $0xc8] sm:$0xff]
    %v240 = vld [vmem:[#allocation8 + $0xd0] sm:$0xff]
    %v241 = vld [vmem:[#allocation8 + $0xd8] sm:$0xff]
    %v242 = vld [vmem:[#allocation8 + $0xe0] sm:$0xff]
    %v243 = vld [vmem:[#allocation8 + $0xe8] sm:$0xff]
    %v244 = vld [vmem:[#allocation8 + $0xf0] sm:$0xff]
    %v245 = vld [vmem:[#allocation8 + $0xf8] sm:$0xff]
    %v246 = vld [vmem:[%s4] sm:$0x3]
    %v248 = vperm.slane %v246, 0
    %v249 = vperm.slane %v246, 1
    %v284 = vunpack.c.l.b16 %v214
    %v285 = vunpack.c.h.b16 %v214
    %v286 = vunpack.c.l.b16 %v215
    %v287 = vunpack.c.h.b16 %v215
    %v288 = vunpack.c.l.b16 %v216
    %v289 = vunpack.c.h.b16 %v216
    %v290 = vunpack.c.l.b16 %v217
    %v291 = vunpack.c.h.b16 %v217
    %v292 = vunpack.c.l.b16 %v218
    %v293 = vunpack.c.h.b16 %v218
    %v294 = vunpack.c.l.b16 %v219
    %v295 = vunpack.c.h.b16 %v219
    %v296 = vunpack.c.l.b16 %v220
    %v297 = vunpack.c.h.b16 %v220
    %v298 = vunpack.c.l.b16 %v221
    %v299 = vunpack.c.h.b16 %v221
    %v300 = vunpack.c.l.b16 %v222
    %v301 = vunpack.c.h.b16 %v222
    %v302 = vunpack.c.l.b16 %v223
    %v303 = vunpack.c.h.b16 %v223
    %v304 = vunpack.c.l.b16 %v224
    %v305 = vunpack.c.h.b16 %v224
    %v306 = vunpack.c.l.b16 %v225
    %v307 = vunpack.c.h.b16 %v225
    %v308 = vunpack.c.l.b16 %v226
    %v309 = vunpack.c.h.b16 %v226
    %v310 = vunpack.c.l.b16 %v227
    %v311 = vunpack.c.h.b16 %v227
    %v312 = vunpack.c.l.b16 %v228
    %v313 = vunpack.c.h.b16 %v228
    %v314 = vunpack.c.l.b16 %v229
    %v315 = vunpack.c.h.b16 %v229
    %v316 = vunpack.c.l.b16 %v230
    %v317 = vunpack.c.h.b16 %v230
    %v318 = vunpack.c.l.b16 %v231
    %v319 = vunpack.c.h.b16 %v231
    %v320 = vunpack.c.l.b16 %v232
    %v321 = vunpack.c.h.b16 %v232
    %v322 = vunpack.c.l.b16 %v233
    %v323 = vunpack.c.h.b16 %v233
    %v324 = vunpack.c.l.b16 %v234
    %v325 = vunpack.c.h.b16 %v234
    %v326 = vunpack.c.l.b16 %v235
    %v327 = vunpack.c.h.b16 %v235
    %v328 = vunpack.c.l.b16 %v236
    %v329 = vunpack.c.h.b16 %v236
    %v330 = vunpack.c.l.b16 %v237
    %v331 = vunpack.c.h.b16 %v237
    %v332 = vunpack.c.l.b16 %v238
    %v333 = vunpack.c.h.b16 %v238
    %v334 = vunpack.c.l.b16 %v239
    %v335 = vunpack.c.h.b16 %v239
    %v336 = vunpack.c.l.b16 %v240
    %v337 = vunpack.c.h.b16 %v240
    %v338 = vunpack.c.l.b16 %v241
    %v339 = vunpack.c.h.b16 %v241
    %v340 = vunpack.c.l.b16 %v242
    %v341 = vunpack.c.h.b16 %v242
    %v342 = vunpack.c.l.b16 %v243
    %v343 = vunpack.c.h.b16 %v243
    %v344 = vunpack.c.l.b16 %v244
    %v345 = vunpack.c.h.b16 %v244
    %v346 = vunpack.c.l.b16 %v245
    %v347 = vunpack.c.h.b16 %v245
    %v348 = vpack.c.b16 %v286, %v284
    %v349 = vpack.c.b16 %v287, %v285
    %v350 = vpack.c.b16 %v290, %v288
    %v351 = vpack.c.b16 %v291, %v289
    %v352 = vpack.c.b16 %v294, %v292
    %v353 = vpack.c.b16 %v295, %v293
    %v354 = vpack.c.b16 %v298, %v296
    %v355 = vpack.c.b16 %v299, %v297
    %v356 = vpack.c.b16 %v302, %v300
    %v357 = vpack.c.b16 %v303, %v301
    %v358 = vpack.c.b16 %v306, %v304
    %v359 = vpack.c.b16 %v307, %v305
    %v360 = vpack.c.b16 %v310, %v308
    %v361 = vpack.c.b16 %v311, %v309
    %v362 = vpack.c.b16 %v314, %v312
    %v363 = vpack.c.b16 %v315, %v313
    %v364 = vpack.c.b16 %v318, %v316
    %v365 = vpack.c.b16 %v319, %v317
    %v366 = vpack.c.b16 %v322, %v320
    %v367 = vpack.c.b16 %v323, %v321
    %v368 = vpack.c.b16 %v326, %v324
    %v369 = vpack.c.b16 %v327, %v325
    %v370 = vpack.c.b16 %v330, %v328
    %v371 = vpack.c.b16 %v331, %v329
    %v372 = vpack.c.b16 %v334, %v332
    %v373 = vpack.c.b16 %v335, %v333
    %v374 = vpack.c.b16 %v338, %v336
    %v375 = vpack.c.b16 %v339, %v337
    %v376 = vpack.c.b16 %v342, %v340
    %v377 = vpack.c.b16 %v343, %v341
    %v378 = vpack.c.b16 %v346, %v344
    %v379 = vpack.c.b16 %v347, %v345
    %412 = vmatpush.bf16.msra.mxu0 %v362
    %413 = vmatpush.bf16.msra.mxu0 %v360
    %414 = vmatpush.bf16.msra.mxu0 %v358
    %415 = vmatpush.bf16.msra.mxu0 %v356
    %416 = vmatpush.bf16.msra.mxu0 %v354
    %417 = vmatpush.bf16.msra.mxu0 %v352
    %418 = vmatpush.bf16.msra.mxu0 %v350
    %419 = vmatpush.bf16.msra.mxu0 %v348
    %420 = vmatmul.bf16.gmra.mxu0 %v212
    %v421 = vpop.f32.mrf.mxu0
    %v422 = vadd.f32 %v248, %v421
    %v423 = vpop.f32.mrf.mxu0
    %424 = vdwg.mxu0
    %425 = vmatpush.bf16.msra.mxu0 %v378
    %426 = vmatpush.bf16.msra.mxu0 %v376
    %427 = vmatpush.bf16.msra.mxu0 %v374
    %428 = vmatpush.bf16.msra.mxu0 %v372
    %429 = vmatpush.bf16.msra.mxu0 %v370
    %430 = vmatpush.bf16.msra.mxu0 %v368
    %431 = vmatpush.bf16.msra.mxu0 %v366
    %432 = vmatpush.bf16.msra.mxu0 %v364
    %433 = vmatmul.bf16.gmra.mxu0 %v213
    %v434 = vpop.f32.mrf.mxu0
    %v435 = vadd.f32 %v422, %v434
    %v436 = vpop.f32.mrf.mxu0
    %437 = vdwg.mxu0
    %438 = vmatpush.bf16.msra.mxu0 %v363
    %439 = vmatpush.bf16.msra.mxu0 %v361
    %440 = vmatpush.bf16.msra.mxu0 %v359
    %441 = vmatpush.bf16.msra.mxu0 %v357
    %442 = vmatpush.bf16.msra.mxu0 %v355
    %443 = vmatpush.bf16.msra.mxu0 %v353
    %444 = vmatpush.bf16.msra.mxu0 %v351
    %445 = vmatpush.bf16.msra.mxu0 %v349
    %446 = vmatmul.bf16.gmra.mxu0 %v212
    %v447 = vpop.f32.mrf.mxu0
    %v448 = vadd.f32 %v249, %v447
    %v449 = vpop.f32.mrf.mxu0
    %450 = vdwg.mxu0
    %451 = vmatpush.bf16.msra.mxu0 %v379
    %452 = vmatpush.bf16.msra.mxu0 %v377
    %453 = vmatpush.bf16.msra.mxu0 %v375
    %454 = vmatpush.bf16.msra.mxu0 %v373
    %455 = vmatpush.bf16.msra.mxu0 %v371
    %456 = vmatpush.bf16.msra.mxu0 %v369
    %457 = vmatpush.bf16.msra.mxu0 %v367
    %458 = vmatpush.bf16.msra.mxu0 %v365
    %459 = vmatmul.bf16.gmra.mxu0 %v213
    %v460 = vpop.f32.mrf.mxu0
    %v461 = vadd.f32 %v448, %v460
    %v462 = vpop.f32.mrf.mxu0
    %463 = vdwg.mxu0
    %v464 = vmul.f32 %v461, 1.442695
    %v465 = vpow.pop %v464
    %v466 = vmul.f32 %v465, %v80
    %v467 = vadd.f32 %v466, %v435
    %468 = vst [vmem:[#allocation10] sm:$0xff] %v467
    // Predicated region
    $region38: #{tpu_custom_call.1} parent=1 // pred_check
      _
    $region39: #{tpu_custom_call.1} parent=1 // pred_check_branch
      %470 = sbr.rel (0) target = $region41
    $region40: #{tpu_custom_call.1} parent=1 // pred_region
      %472 = vsyncadd [#allocation4], 0
      %s474 = sshll.u32 [#allocation10], 4
      %s475 = int_to_ptr.vmem [resolvable:$true] %s474
      %s476 = sshll.u32 %s5, 4
      %s477 = int_to_ptr.hbm [resolvable:$true] %s476
      %479 = dma.vmem_to_hbm [thread:$0]  %s475, 128, %s477, [#allocation4]
    $region41: #{tpu_custom_call.1} parent=1 // pred_fallthru
      _
    // Predicated region
    $region42: #{tpu_custom_call.1} parent=1 // pred_check
      _
    $region43: #{tpu_custom_call.1} parent=1 // pred_check_branch
      %481 = sbr.rel (0) target = $region45
    $region44: #{tpu_custom_call.1} parent=1 // pred_region
      %483 = dma.done [#allocation4], 128
    $region45: #{tpu_custom_call.1} parent=1 // pred_fallthru
      _
    %484 = vsyncpa [#allocation3], 1
    %485 = vsyncpa [#allocation6], 1
    %486 = vsyncpa [#allocation9], 1
    %487 = vsyncpa [#allocation4], 1

</llo_original>
